<compile_context>
chip_gen: v5e
topology: v5e:2x2
jax: 0.10.0
libtpu: 0.0.40
codegen_flags: <defaults>
</compile_context>

<pallas_src>
import functools

import jax
import jax.numpy as jnp
import numpy as np
from jax.experimental import pallas as pl
from jax.experimental.pallas import tpu as pltpu


# ----------------------------------------------------------------------------
# Grid sizing: 1 fat step on 1-TC parts (v5e/v6e), 2 parallel steps on 2-TC
# parts (v7x, and megacore v4/v5p) so the "parallel" grid axis shards across
# TensorCores instead of idling half the chip.
# ----------------------------------------------------------------------------
def _default_num_steps(n_images: int) -> int:
    try:
        kind = jax.devices()[0].device_kind.lower()
    except Exception:
        kind = ""
    two_tc = any(tag in kind for tag in ("v7", "v4", "v5p"))
    steps = 2 if (two_tc and n_images >= 2) else 1
    if n_images % steps:
        steps = 1
    return steps


# ----------------------------------------------------------------------------
# Per-tap validity masks for zero padding, pre-broadcast to (9, C, B*HW):
#  * tiled per image along the lane axis (so roll wrap across image / block
#    boundaries is zeroed exactly at the padded positions),
#  * broadcast over C sublanes host-side (no in-kernel broadcast_in_dim).
# mask[tap, c, b*HW + i*W + j] == 1 iff (i + kh - 1, j + kw - 1) is in-bounds.
# ----------------------------------------------------------------------------
def _tap_masks(H, W, C, images_per_block):
    i = np.arange(H)[:, None]
    j = np.arange(W)[None, :]
    m = np.empty((9, H * W), np.float32)
    for kh in range(3):
        for kw in range(3):
            dh, dw = kh - 1, kw - 1
            valid = (i + dh >= 0) & (i + dh < H) & (j + dw >= 0) & (j + dw < W)
            m[kh * 3 + kw] = valid.astype(np.float32).reshape(-1)
    m = np.tile(m, (1, images_per_block))                       # (9, B*HW)
    m = np.broadcast_to(m[:, None, :], (9, C, images_per_block * H * W)).copy()
    return jnp.asarray(m)


# ----------------------------------------------------------------------------
# Kernel: one image group per grid step, activations as (C, B*HW).
# ----------------------------------------------------------------------------
def basic_block_kernel(x_ref, w1_ref, w2_ref, b1_ref, b2_ref, mask_ref, out_ref,
                       *, width):
    # x_ref   : (C, L)       f32   flattened (C, B*HW) input (also the residual)
    # w1_ref  : (C, 9*C)     bf16  conv1 taps (kh, kw, cin) with BN1 scale folded
    # w2_ref  : (C, 9*C)     bf16  conv2 taps with BN2 scale folded
    # b*_ref  : (C, 1)       f32   folded BN bias
    # mask_ref: (9, C, L)    f32   per-tap zero-padding masks (tiled per image)
    # out_ref : (C, L)       f32
    x = x_ref[...]                      # residual, aligned lane-dense read
    lanes = x.shape[1]

    def im2col(a):                      # (C, L) f32 -> (9*C, L) bf16
        cols = []
        for kh in range(3):
            for kw in range(3):
                d = (kh - 1) * width + (kw - 1)     # static flat displacement
                if d == 0:
                    cols.append(a.astype(jnp.bfloat16))      # center tap
                    continue
                # pltpu.roll follows jnp.roll: out[:, p] = in[:, p - shift],
                # so shift = (-d) % lanes puts in[:, p + d] at column p.  Any
                # wrapped / image-boundary-crossing column is exactly one the
                # mask zeroes.  Cast each column to bf16 immediately (no big
                # f32 concat temp; pack overlaps with remaining XLU rolls).
                shifted = pltpu.roll(a, (-d) % lanes, 1)
                cols.append((shifted * mask_ref[kh * 3 + kw]).astype(jnp.bfloat16))
        # Concatenate along the sublane axis -> (9*C, L) bf16 MXU operand.
        return jnp.concatenate(cols, axis=0)

    # conv1 + folded BN1 + ReLU : single fused-K MXU matmul, f32 accumulation
    y1 = jnp.dot(w1_ref[...], im2col(x), preferred_element_type=jnp.float32)
    y1 = jnp.maximum(y1 + b1_ref[...], 0.0)

    # conv2 + folded BN2 + residual + ReLU
    y2 = jnp.dot(w2_ref[...], im2col(y1), preferred_element_type=jnp.float32)
    out_ref[...] = jnp.maximum(y2 + b2_ref[...] + x, 0.0)


# ----------------------------------------------------------------------------
# Wrapper: NCHW in / NCHW out, PyTorch OIHW conv weights, eval-mode BN folded
# to per-channel affine (scale, bias).
# ----------------------------------------------------------------------------
def basic_block(x_nchw, w1_oihw, w2_oihw, scale1, bias1, scale2, bias2,
                *, num_steps=None):
    N, Cin, H, W = x_nchw.shape
    Cout = w1_oihw.shape[0]
    assert Cin == Cout, "stride=1 / downsample=None BasicBlock needs inplanes == planes"
    HW = H * W

    if num_steps is None:
        num_steps = _default_num_steps(N)
    if N % num_steps:
        num_steps = 1
    B = N // num_steps                   # images per grid step
    L = B * HW                           # lane width per step
    # Lane-dim constraint: block last dim must be a multiple of 128 or the full axis.
    if num_steps > 1 and L % 128 != 0:
        num_steps, B, L = 1, N, N * HW

    # (N, C, H, W) -> (C, N*HW): channels on sublanes, batch*spatial on lanes.
    x_cl = jnp.transpose(x_nchw, (1, 0, 2, 3)).reshape(Cin, N * HW).astype(jnp.float32)

    # (O, I, KH, KW) -> (O, KH, KW, I) -> (O, 9*I); fold BN scale; bf16 for MXU.
    def flatten_w(w_oihw, scale):
        wf = jnp.transpose(w_oihw, (0, 2, 3, 1)).reshape(w_oihw.shape[0], -1)
        return (wf * scale[:, None]).astype(jnp.bfloat16)

    w1f = flatten_w(w1_oihw, scale1)
    w2f = flatten_w(w2_oihw, scale2)
    b1 = bias1.reshape(Cout, 1).astype(jnp.float32)
    b2 = bias2.reshape(Cout, 1).astype(jnp.float32)
    masks = _tap_masks(H, W, Cin, B)     # (9, Cin, L)

    kernel = functools.partial(basic_block_kernel, width=W)

    out_cl = pl.pallas_call(
        kernel,
        out_shape=jax.ShapeDtypeStruct((Cout, N * HW), jnp.float32),
        grid_spec=pltpu.PrefetchScalarGridSpec(
            num_scalar_prefetch=0,
            grid=(num_steps,),
            in_specs=[
                pl.BlockSpec((Cin, L), lambda s: (0, s)),
                pl.BlockSpec((Cout, 9 * Cin), lambda s: (0, 0)),
                pl.BlockSpec((Cout, 9 * Cout), lambda s: (0, 0)),
                pl.BlockSpec((Cout, 1), lambda s: (0, 0)),
                pl.BlockSpec((Cout, 1), lambda s: (0, 0)),
                pl.BlockSpec((9, Cin, L), lambda s: (0, 0, 0)),
            ],
            out_specs=pl.BlockSpec((Cout, L), lambda s: (0, s)),
        ),
        compiler_params=pltpu.CompilerParams(
            dimension_semantics=("parallel",)),
    )(x_cl, w1f, w2f, b1, b2, masks)

    return jnp.transpose(out_cl.reshape(Cout, N, H, W), (1, 0, 2, 3))


# ----------------------------------------------------------------------------
# Pure-JAX f32 reference (NCHW, eval-mode BN as scale/bias).
# ----------------------------------------------------------------------------
def basic_block_ref(x, w1, w2, s1, b1, s2, b2):
    def conv(v, w):
        return jax.lax.conv_general_dilated(
            v, w, window_strides=(1, 1), padding=((1, 1), (1, 1)),
            dimension_numbers=("NCHW", "OIHW", "NCHW"))

    def bn(v, s, b):
        return v * s[None, :, None, None] + b[None, :, None, None]

    y = jnp.maximum(bn(conv(x, w1), s1, b1), 0.0)
    y = bn(conv(y, w2), s2, b2) + x
    return jnp.maximum(y, 0.0)


if __name__ == "__main__":
    # BasicBlock(inplanes=8, planes=8, stride=1, downsample=None)
    N, C, H, W = 2, 8, 16, 16

    key = jax.random.PRNGKey(0)
    keys = jax.random.split(key, 11)

    # PyTorch conventions: NCHW input, OIHW conv weights.
    x = jax.random.normal(keys[0], (N, C, H, W), jnp.float32)
    w1 = 0.1 * jax.random.normal(keys[1], (C, C, 3, 3), jnp.float32)
    w2 = 0.1 * jax.random.normal(keys[2], (C, C, 3, 3), jnp.float32)

    # Eval-mode BatchNorm parameters (deterministic, non-trivial).
    eps = 1e-5
    gamma1 = 1.0 + 0.1 * jax.random.normal(keys[3], (C,), jnp.float32)
    beta1 = 0.1 * jax.random.normal(keys[4], (C,), jnp.float32)
    mean1 = 0.1 * jax.random.normal(keys[5], (C,), jnp.float32)
    var1 = 0.5 + jnp.abs(jax.random.normal(keys[6], (C,), jnp.float32))
    gamma2 = 1.0 + 0.1 * jax.random.normal(keys[7], (C,), jnp.float32)
    beta2 = 0.1 * jax.random.normal(keys[8], (C,), jnp.float32)
    mean2 = 0.1 * jax.random.normal(keys[9], (C,), jnp.float32)
    var2 = 0.5 + jnp.abs(jax.random.normal(keys[10], (C,), jnp.float32))

    # Fold BN: y = conv(x) * scale + bias.
    scale1 = gamma1 / jnp.sqrt(var1 + eps)
    bias1 = beta1 - mean1 * scale1
    scale2 = gamma2 / jnp.sqrt(var2 + eps)
    bias2 = beta2 - mean2 * scale2

    out = jax.block_until_ready(basic_block(x, w1, w2, scale1, bias1, scale2, bias2))
    ref = jax.block_until_ready(basic_block_ref(x, w1, w2, scale1, bias1, scale2, bias2))

    # bf16 MXU operands (f32 accumulation) vs. the f32 reference -> loosened tol.
    np.testing.assert_allclose(np.asarray(out), np.asarray(ref), atol=3e-2, rtol=3e-2)
    assert out.shape == (N, C, H, W)

    print("KERNEL_OK")
</pallas_src>

<mosaic_0001>
module attributes {stable_mosaic.version = 11 : i64} {
  func.func @basic_block_kernel(%arg0: i32, %arg1: memref<8x512xf32, #tpu.memory_space<vmem>>, %arg2: memref<8x72xbf16, #tpu.memory_space<vmem>>, %arg3: memref<8x72xbf16, #tpu.memory_space<vmem>>, %arg4: memref<8x1xf32, #tpu.memory_space<vmem>>, %arg5: memref<8x1xf32, #tpu.memory_space<vmem>>, %arg6: memref<9x8x512xf32, #tpu.memory_space<vmem>>, %arg7: memref<8x512xf32, #tpu.memory_space<vmem>>) attributes {dimension_semantics = [#tpu.dimension_semantics<parallel>], iteration_bounds = array<i64: 1>, scalar_prefetch = 0 : i64, scratch_operands = 0 : i64, tpu.core_type = #tpu.core_type<tc>, window_params = [{transform_indices = @transform_0, window_bounds = array<i64: 8, 512>}, {pipeline_mode = #tpu.pipeline_mode<synchronous>, transform_indices = @transform_1, window_bounds = array<i64: 8, 72>}, {pipeline_mode = #tpu.pipeline_mode<synchronous>, transform_indices = @transform_2, window_bounds = array<i64: 8, 72>}, {pipeline_mode = #tpu.pipeline_mode<synchronous>, transform_indices = @transform_3, window_bounds = array<i64: 8, 1>}, {pipeline_mode = #tpu.pipeline_mode<synchronous>, transform_indices = @transform_4, window_bounds = array<i64: 8, 1>}, {pipeline_mode = #tpu.pipeline_mode<synchronous>, transform_indices = @transform_5, window_bounds = array<i64: 9, 8, 512>}, {transform_indices = @transform_6, window_bounds = array<i64: 8, 512>}]} {
    %c0 = arith.constant 0 : index
    %c0_0 = arith.constant 0 : index
    %0 = vector.load %arg1[%c0, %c0_0] : memref<8x512xf32, #tpu.memory_space<vmem>>, vector<8x512xf32>
    %c0_1 = arith.constant 0 : index
    %c0_2 = arith.constant 0 : index
    %1 = vector.load %arg2[%c0_1, %c0_2] : memref<8x72xbf16, #tpu.memory_space<vmem>>, vector<8x72xbf16>
    %c17_i32 = arith.constant 17 : i32
    %2 = tpu.dynamic_rotate %0 by %c17_i32 dim 1 : vector<8x512xf32>, i32 -> vector<8x512xf32>
    %c0_3 = arith.constant 0 : index
    %c0_4 = arith.constant 0 : index
    %c0_5 = arith.constant 0 : index
    %3 = vector.load %arg6[%c0_3, %c0_4, %c0_5] : memref<9x8x512xf32, #tpu.memory_space<vmem>>, vector<1x8x512xf32>
    %4 = vector.shape_cast %3 : vector<1x8x512xf32> to vector<8x512xf32>
    %5 = arith.mulf %2, %4 : vector<8x512xf32>
    %6 = arith.truncf %5 : vector<8x512xf32> to vector<8x512xbf16>
    %c16_i32 = arith.constant 16 : i32
    %7 = tpu.dynamic_rotate %0 by %c16_i32 dim 1 : vector<8x512xf32>, i32 -> vector<8x512xf32>
    %c1 = arith.constant 1 : index
    %c0_6 = arith.constant 0 : index
    %c0_7 = arith.constant 0 : index
    %8 = vector.load %arg6[%c1, %c0_6, %c0_7] : memref<9x8x512xf32, #tpu.memory_space<vmem>>, vector<1x8x512xf32>
    %9 = vector.shape_cast %8 : vector<1x8x512xf32> to vector<8x512xf32>
    %10 = arith.mulf %7, %9 : vector<8x512xf32>
    %11 = arith.truncf %10 : vector<8x512xf32> to vector<8x512xbf16>
    %c15_i32 = arith.constant 15 : i32
    %12 = tpu.dynamic_rotate %0 by %c15_i32 dim 1 : vector<8x512xf32>, i32 -> vector<8x512xf32>
    %c2 = arith.constant 2 : index
    %c0_8 = arith.constant 0 : index
    %c0_9 = arith.constant 0 : index
    %13 = vector.load %arg6[%c2, %c0_8, %c0_9] : memref<9x8x512xf32, #tpu.memory_space<vmem>>, vector<1x8x512xf32>
    %14 = vector.shape_cast %13 : vector<1x8x512xf32> to vector<8x512xf32>
    %15 = arith.mulf %12, %14 : vector<8x512xf32>
    %16 = arith.truncf %15 : vector<8x512xf32> to vector<8x512xbf16>
    %c1_i32 = arith.constant 1 : i32
    %17 = tpu.dynamic_rotate %0 by %c1_i32 dim 1 : vector<8x512xf32>, i32 -> vector<8x512xf32>
    %c3 = arith.constant 3 : index
    %c0_10 = arith.constant 0 : index
    %c0_11 = arith.constant 0 : index
    %18 = vector.load %arg6[%c3, %c0_10, %c0_11] : memref<9x8x512xf32, #tpu.memory_space<vmem>>, vector<1x8x512xf32>
    %19 = vector.shape_cast %18 : vector<1x8x512xf32> to vector<8x512xf32>
    %20 = arith.mulf %17, %19 : vector<8x512xf32>
    %21 = arith.truncf %20 : vector<8x512xf32> to vector<8x512xbf16>
    %22 = arith.truncf %0 : vector<8x512xf32> to vector<8x512xbf16>
    %c511_i32 = arith.constant 511 : i32
    %23 = tpu.dynamic_rotate %0 by %c511_i32 dim 1 : vector<8x512xf32>, i32 -> vector<8x512xf32>
    %c5 = arith.constant 5 : index
    %c0_12 = arith.constant 0 : index
    %c0_13 = arith.constant 0 : index
    %24 = vector.load %arg6[%c5, %c0_12, %c0_13] : memref<9x8x512xf32, #tpu.memory_space<vmem>>, vector<1x8x512xf32>
    %25 = vector.shape_cast %24 : vector<1x8x512xf32> to vector<8x512xf32>
    %26 = arith.mulf %23, %25 : vector<8x512xf32>
    %27 = arith.truncf %26 : vector<8x512xf32> to vector<8x512xbf16>
    %c497_i32 = arith.constant 497 : i32
    %28 = tpu.dynamic_rotate %0 by %c497_i32 dim 1 : vector<8x512xf32>, i32 -> vector<8x512xf32>
    %c6 = arith.constant 6 : index
    %c0_14 = arith.constant 0 : index
    %c0_15 = arith.constant 0 : index
    %29 = vector.load %arg6[%c6, %c0_14, %c0_15] : memref<9x8x512xf32, #tpu.memory_space<vmem>>, vector<1x8x512xf32>
    %30 = vector.shape_cast %29 : vector<1x8x512xf32> to vector<8x512xf32>
    %31 = arith.mulf %28, %30 : vector<8x512xf32>
    %32 = arith.truncf %31 : vector<8x512xf32> to vector<8x512xbf16>
    %c496_i32 = arith.constant 496 : i32
    %33 = tpu.dynamic_rotate %0 by %c496_i32 dim 1 : vector<8x512xf32>, i32 -> vector<8x512xf32>
    %c7 = arith.constant 7 : index
    %c0_16 = arith.constant 0 : index
    %c0_17 = arith.constant 0 : index
    %34 = vector.load %arg6[%c7, %c0_16, %c0_17] : memref<9x8x512xf32, #tpu.memory_space<vmem>>, vector<1x8x512xf32>
    %35 = vector.shape_cast %34 : vector<1x8x512xf32> to vector<8x512xf32>
    %36 = arith.mulf %33, %35 : vector<8x512xf32>
    %37 = arith.truncf %36 : vector<8x512xf32> to vector<8x512xbf16>
    %c495_i32 = arith.constant 495 : i32
    %38 = tpu.dynamic_rotate %0 by %c495_i32 dim 1 : vector<8x512xf32>, i32 -> vector<8x512xf32>
    %c8 = arith.constant 8 : index
    %c0_18 = arith.constant 0 : index
    %c0_19 = arith.constant 0 : index
    %39 = vector.load %arg6[%c8, %c0_18, %c0_19] : memref<9x8x512xf32, #tpu.memory_space<vmem>>, vector<1x8x512xf32>
    %40 = vector.shape_cast %39 : vector<1x8x512xf32> to vector<8x512xf32>
    %41 = arith.mulf %38, %40 : vector<8x512xf32>
    %42 = arith.truncf %41 : vector<8x512xf32> to vector<8x512xbf16>
    %43 = tpu.concatenate %6, %11, %16, %21, %22, %27, %32, %37, %42 in 0 : vector<8x512xbf16>, vector<8x512xbf16>, vector<8x512xbf16>, vector<8x512xbf16>, vector<8x512xbf16>, vector<8x512xbf16>, vector<8x512xbf16>, vector<8x512xbf16>, vector<8x512xbf16> -> vector<72x512xbf16>
    %cst = arith.constant dense<0.000000e+00> : vector<8x512xf32>
    %44 = tpu.matmul %1, %43, %cst {dimension_numbers = #tpu.dot_dimension_numbers<[1], [0], [0], [1], [0, 0, 1, 1], [], []>} : vector<8x72xbf16>, vector<72x512xbf16>, vector<8x512xf32> -> vector<8x512xf32>
    %c0_20 = arith.constant 0 : index
    %c0_21 = arith.constant 0 : index
    %45 = vector.load %arg4[%c0_20, %c0_21] : memref<8x1xf32, #tpu.memory_space<vmem>>, vector<8x1xf32>
    %46 = vector.broadcast %45 : vector<8x1xf32> to vector<8x512xf32>
    %47 = arith.addf %44, %46 : vector<8x512xf32>
    %cst_22 = arith.constant 0.000000e+00 : f32
    %48 = vector.broadcast %cst_22 : f32 to vector<8x512xf32>
    %49 = arith.maximumf %47, %48 : vector<8x512xf32>
    %c0_23 = arith.constant 0 : index
    %c0_24 = arith.constant 0 : index
    %50 = vector.load %arg3[%c0_23, %c0_24] : memref<8x72xbf16, #tpu.memory_space<vmem>>, vector<8x72xbf16>
    %c17_i32_25 = arith.constant 17 : i32
    %51 = tpu.dynamic_rotate %49 by %c17_i32_25 dim 1 : vector<8x512xf32>, i32 -> vector<8x512xf32>
    %c0_26 = arith.constant 0 : index
    %c0_27 = arith.constant 0 : index
    %c0_28 = arith.constant 0 : index
    %52 = vector.load %arg6[%c0_26, %c0_27, %c0_28] : memref<9x8x512xf32, #tpu.memory_space<vmem>>, vector<1x8x512xf32>
    %53 = vector.shape_cast %52 : vector<1x8x512xf32> to vector<8x512xf32>
    %54 = arith.mulf %51, %53 : vector<8x512xf32>
    %55 = arith.truncf %54 : vector<8x512xf32> to vector<8x512xbf16>
    %c16_i32_29 = arith.constant 16 : i32
    %56 = tpu.dynamic_rotate %49 by %c16_i32_29 dim 1 : vector<8x512xf32>, i32 -> vector<8x512xf32>
    %c1_30 = arith.constant 1 : index
    %c0_31 = arith.constant 0 : index
    %c0_32 = arith.constant 0 : index
    %57 = vector.load %arg6[%c1_30, %c0_31, %c0_32] : memref<9x8x512xf32, #tpu.memory_space<vmem>>, vector<1x8x512xf32>
    %58 = vector.shape_cast %57 : vector<1x8x512xf32> to vector<8x512xf32>
    %59 = arith.mulf %56, %58 : vector<8x512xf32>
    %60 = arith.truncf %59 : vector<8x512xf32> to vector<8x512xbf16>
    %c15_i32_33 = arith.constant 15 : i32
    %61 = tpu.dynamic_rotate %49 by %c15_i32_33 dim 1 : vector<8x512xf32>, i32 -> vector<8x512xf32>
    %c2_34 = arith.constant 2 : index
    %c0_35 = arith.constant 0 : index
    %c0_36 = arith.constant 0 : index
    %62 = vector.load %arg6[%c2_34, %c0_35, %c0_36] : memref<9x8x512xf32, #tpu.memory_space<vmem>>, vector<1x8x512xf32>
    %63 = vector.shape_cast %62 : vector<1x8x512xf32> to vector<8x512xf32>
    %64 = arith.mulf %61, %63 : vector<8x512xf32>
    %65 = arith.truncf %64 : vector<8x512xf32> to vector<8x512xbf16>
    %c1_i32_37 = arith.constant 1 : i32
    %66 = tpu.dynamic_rotate %49 by %c1_i32_37 dim 1 : vector<8x512xf32>, i32 -> vector<8x512xf32>
    %c3_38 = arith.constant 3 : index
    %c0_39 = arith.constant 0 : index
    %c0_40 = arith.constant 0 : index
    %67 = vector.load %arg6[%c3_38, %c0_39, %c0_40] : memref<9x8x512xf32, #tpu.memory_space<vmem>>, vector<1x8x512xf32>
    %68 = vector.shape_cast %67 : vector<1x8x512xf32> to vector<8x512xf32>
    %69 = arith.mulf %66, %68 : vector<8x512xf32>
    %70 = arith.truncf %69 : vector<8x512xf32> to vector<8x512xbf16>
    %71 = arith.truncf %49 : vector<8x512xf32> to vector<8x512xbf16>
    %c511_i32_41 = arith.constant 511 : i32
    %72 = tpu.dynamic_rotate %49 by %c511_i32_41 dim 1 : vector<8x512xf32>, i32 -> vector<8x512xf32>
    %c5_42 = arith.constant 5 : index
    %c0_43 = arith.constant 0 : index
    %c0_44 = arith.constant 0 : index
    %73 = vector.load %arg6[%c5_42, %c0_43, %c0_44] : memref<9x8x512xf32, #tpu.memory_space<vmem>>, vector<1x8x512xf32>
    %74 = vector.shape_cast %73 : vector<1x8x512xf32> to vector<8x512xf32>
    %75 = arith.mulf %72, %74 : vector<8x512xf32>
    %76 = arith.truncf %75 : vector<8x512xf32> to vector<8x512xbf16>
    %c497_i32_45 = arith.constant 497 : i32
    %77 = tpu.dynamic_rotate %49 by %c497_i32_45 dim 1 : vector<8x512xf32>, i32 -> vector<8x512xf32>
    %c6_46 = arith.constant 6 : index
    %c0_47 = arith.constant 0 : index
    %c0_48 = arith.constant 0 : index
    %78 = vector.load %arg6[%c6_46, %c0_47, %c0_48] : memref<9x8x512xf32, #tpu.memory_space<vmem>>, vector<1x8x512xf32>
    %79 = vector.shape_cast %78 : vector<1x8x512xf32> to vector<8x512xf32>
    %80 = arith.mulf %77, %79 : vector<8x512xf32>
    %81 = arith.truncf %80 : vector<8x512xf32> to vector<8x512xbf16>
    %c496_i32_49 = arith.constant 496 : i32
    %82 = tpu.dynamic_rotate %49 by %c496_i32_49 dim 1 : vector<8x512xf32>, i32 -> vector<8x512xf32>
    %c7_50 = arith.constant 7 : index
    %c0_51 = arith.constant 0 : index
    %c0_52 = arith.constant 0 : index
    %83 = vector.load %arg6[%c7_50, %c0_51, %c0_52] : memref<9x8x512xf32, #tpu.memory_space<vmem>>, vector<1x8x512xf32>
    %84 = vector.shape_cast %83 : vector<1x8x512xf32> to vector<8x512xf32>
    %85 = arith.mulf %82, %84 : vector<8x512xf32>
    %86 = arith.truncf %85 : vector<8x512xf32> to vector<8x512xbf16>
    %c495_i32_53 = arith.constant 495 : i32
    %87 = tpu.dynamic_rotate %49 by %c495_i32_53 dim 1 : vector<8x512xf32>, i32 -> vector<8x512xf32>
    %c8_54 = arith.constant 8 : index
    %c0_55 = arith.constant 0 : index
    %c0_56 = arith.constant 0 : index
    %88 = vector.load %arg6[%c8_54, %c0_55, %c0_56] : memref<9x8x512xf32, #tpu.memory_space<vmem>>, vector<1x8x512xf32>
    %89 = vector.shape_cast %88 : vector<1x8x512xf32> to vector<8x512xf32>
    %90 = arith.mulf %87, %89 : vector<8x512xf32>
    %91 = arith.truncf %90 : vector<8x512xf32> to vector<8x512xbf16>
    %92 = tpu.concatenate %55, %60, %65, %70, %71, %76, %81, %86, %91 in 0 : vector<8x512xbf16>, vector<8x512xbf16>, vector<8x512xbf16>, vector<8x512xbf16>, vector<8x512xbf16>, vector<8x512xbf16>, vector<8x512xbf16>, vector<8x512xbf16>, vector<8x512xbf16> -> vector<72x512xbf16>
    %cst_57 = arith.constant dense<0.000000e+00> : vector<8x512xf32>
    %93 = tpu.matmul %50, %92, %cst_57 {dimension_numbers = #tpu.dot_dimension_numbers<[1], [0], [0], [1], [0, 0, 1, 1], [], []>} : vector<8x72xbf16>, vector<72x512xbf16>, vector<8x512xf32> -> vector<8x512xf32>
    %c0_58 = arith.constant 0 : index
    %c0_59 = arith.constant 0 : index
    %94 = vector.load %arg5[%c0_58, %c0_59] : memref<8x1xf32, #tpu.memory_space<vmem>>, vector<8x1xf32>
    %95 = vector.broadcast %94 : vector<8x1xf32> to vector<8x512xf32>
    %96 = arith.addf %93, %95 : vector<8x512xf32>
    %97 = arith.addf %96, %0 : vector<8x512xf32>
    %cst_60 = arith.constant 0.000000e+00 : f32
    %98 = vector.broadcast %cst_60 : f32 to vector<8x512xf32>
    %99 = arith.maximumf %97, %98 : vector<8x512xf32>
    %c0_61 = arith.constant 0 : index
    %c0_62 = arith.constant 0 : index
    %100 = vector.load %arg7[%c0_61, %c0_62] : memref<8x512xf32, #tpu.memory_space<vmem>>, vector<8x512xf32>
    tpu.vector_store %arg7[%c0_61, %c0_62], %99 {strides = array<i32>} : memref<8x512xf32, #tpu.memory_space<vmem>>, vector<8x512xf32>,
    return
  }
  func.func @transform_0(%arg0: i32) -> (i32, i32) {
    %c0_i32 = arith.constant 0 : i32
    %c0_i32_0 = arith.constant 0 : i32
    return %c0_i32, %arg0 : i32, i32
  }
  func.func @transform_1(%arg0: i32) -> (i32, i32) {
    %c0_i32 = arith.constant 0 : i32
    %c0_i32_0 = arith.constant 0 : i32
    %c0_i32_1 = arith.constant 0 : i32
    return %c0_i32, %c0_i32_0 : i32, i32
  }
  func.func @transform_2(%arg0: i32) -> (i32, i32) {
    %c0_i32 = arith.constant 0 : i32
    %c0_i32_0 = arith.constant 0 : i32
    %c0_i32_1 = arith.constant 0 : i32
    return %c0_i32, %c0_i32_0 : i32, i32
  }
  func.func @transform_3(%arg0: i32) -> (i32, i32) {
    %c0_i32 = arith.constant 0 : i32
    %c0_i32_0 = arith.constant 0 : i32
    %c0_i32_1 = arith.constant 0 : i32
    return %c0_i32, %c0_i32_0 : i32, i32
  }
  func.func @transform_4(%arg0: i32) -> (i32, i32) {
    %c0_i32 = arith.constant 0 : i32
    %c0_i32_0 = arith.constant 0 : i32
    %c0_i32_1 = arith.constant 0 : i32
    return %c0_i32, %c0_i32_0 : i32, i32
  }
  func.func @transform_5(%arg0: i32) -> (i32, i32, i32) {
    %c0_i32 = arith.constant 0 : i32
    %c0_i32_0 = arith.constant 0 : i32
    %c0_i32_1 = arith.constant 0 : i32
    %c0_i32_2 = arith.constant 0 : i32
    return %c0_i32, %c0_i32_0, %c0_i32_1 : i32, i32, i32
  }
  func.func @transform_6(%arg0: i32) -> (i32, i32) {
    %c0_i32 = arith.constant 0 : i32
    %c0_i32_0 = arith.constant 0 : i32
    return %c0_i32, %arg0 : i32, i32
  }
}

</mosaic_0001>

<llo_original>
// kernel: tpu_custom_call.1
$region0: #{tpu_custom_call.1}
  #allocation0 [shape = 'u32[]', space=smem, size = 0x4, offset = 0x4, fixed_abs, tag = 'smem constant byte address 0x4 - core index']
  #allocation1 [shape = 'u32[72,128]{1,0:T(1,128)}', space=vmem, size = 0x9000, scoped, tag = 'internal scratch']
  %s0 = inlined_call_operand.hbm [shape: f32[8,512], index: 0, kind: input, shape index: {}]
  %s1 = inlined_call_operand.vmem [shape: bf16[8,72], index: 1, kind: input, shape index: {}]
  %s2 = inlined_call_operand.vmem [shape: bf16[8,72], index: 2, kind: input, shape index: {}]
  %s3 = inlined_call_operand.vmem [shape: f32[8,1], index: 3, kind: input, shape index: {}]
  %s4 = inlined_call_operand.vmem [shape: f32[8,1], index: 4, kind: input, shape index: {}]
  %s5 = inlined_call_operand.hbm [shape: f32[9,8,512], index: 5, kind: input, shape index: {}]
  %s6 = inlined_call_operand.hbm [shape: f32[8,512], index: 6, kind: output, shape index: {}]
  %s7 = sld [smem:[#allocation0]]
  $region42: #{tpu_custom_call.1} parent=0
    _
  %s9 = ssub.s32 1, %s7
  %s10 = scalar_select 0, %s9, %s7
  $region1: #{tpu_custom_call.1} parent=0
    #allocation2 [shape = 'u8[16384]{0}', space=vmem, size = 0x4000, scoped, tag = 'input window, operand 0, single buffered']
    #allocation3 [shape = 's32[1]{0}', space=sflag, size = 0x4, scoped, tag = 'scoped memory for tpu_custom_call.1']
    #allocation4 [shape = 's32[1]{0}', space=sflag, size = 0x4, scoped, tag = 'scoped memory for tpu_custom_call.1']
    #allocation5 [shape = 'u8[147456]{0}', space=vmem, size = 0x24000, scoped, tag = 'input window, operand 5, single buffered']
    #allocation6 [shape = 's32[1]{0}', space=sflag, size = 0x4, scoped, tag = 'scoped memory for tpu_custom_call.1']
    #allocation7 [shape = 'u8[16384]{0}', space=vmem, size = 0x4000, scoped, tag = 'output window, operand 0, single buffered']
    %11 = vsyncpa [#allocation3], 0
    %12 = vsyncpa [#allocation6], 0
    %13 = vsyncpa [#allocation4], 0
    // Predicated region
    $region2: #{tpu_custom_call.1} parent=1 // pred_check
      _
    $region3: #{tpu_custom_call.1} parent=1 // pred_check_branch
      %15 = sbr.rel (0) target = $region5
    $region4: #{tpu_custom_call.1} parent=1 // pred_region
      %17 = vsyncadd [#allocation3], 0
      %s19 = sshll.u32 %s0, 4
      %s20 = int_to_ptr.hbm [resolvable:$true] %s19
      %s21 = sshll.u32 [#allocation2], 4
      %s22 = int_to_ptr.vmem [resolvable:$true] %s21
      %24 = dma.hbm_to_vmem [thread:$0]  %s20, 512, %s22, [#allocation3]
    $region5: #{tpu_custom_call.1} parent=1 // pred_fallthru
      _
    // Predicated region
    $region6: #{tpu_custom_call.1} parent=1 // pred_check
      _
    $region7: #{tpu_custom_call.1} parent=1 // pred_check_branch
      %26 = sbr.rel (0) target = $region9
    $region8: #{tpu_custom_call.1} parent=1 // pred_region
      _
    $region9: #{tpu_custom_call.1} parent=1 // pred_fallthru
      _
    // Predicated region
    $region10: #{tpu_custom_call.1} parent=1 // pred_check
      _
    $region11: #{tpu_custom_call.1} parent=1 // pred_check_branch
      %28 = sbr.rel (0) target = $region13
    $region12: #{tpu_custom_call.1} parent=1 // pred_region
      _
    $region13: #{tpu_custom_call.1} parent=1 // pred_fallthru
      _
    // Predicated region
    $region14: #{tpu_custom_call.1} parent=1 // pred_check
      _
    $region15: #{tpu_custom_call.1} parent=1 // pred_check_branch
      %30 = sbr.rel (0) target = $region17
    $region16: #{tpu_custom_call.1} parent=1 // pred_region
      _
    $region17: #{tpu_custom_call.1} parent=1 // pred_fallthru
      _
    // Predicated region
    $region18: #{tpu_custom_call.1} parent=1 // pred_check
      _
    $region19: #{tpu_custom_call.1} parent=1 // pred_check_branch
      %32 = sbr.rel (0) target = $region21
    $region20: #{tpu_custom_call.1} parent=1 // pred_region
      _
    $region21: #{tpu_custom_call.1} parent=1 // pred_fallthru
      _
    // Predicated region
    $region22: #{tpu_custom_call.1} parent=1 // pred_check
      _
    $region23: #{tpu_custom_call.1} parent=1 // pred_check_branch
      %34 = sbr.rel (0) target = $region25
    $region24: #{tpu_custom_call.1} parent=1 // pred_region
      %36 = vsyncadd [#allocation6], 0
      %s37 = sshll.u32 %s5, 4
      %s38 = int_to_ptr.hbm [resolvable:$true] %s37
      %s39 = sshll.u32 [#allocation5], 4
      %s40 = int_to_ptr.vmem [resolvable:$true] %s39
      %45 = dma.hbm_to_vmem [thread:$0]  %s38, 4608, %s40, [#allocation6], 512, 512, 32
    $region25: #{tpu_custom_call.1} parent=1 // pred_fallthru
      _
    // Predicated region
    $region26: #{tpu_custom_call.1} parent=1 // pred_check
      _
    $region27: #{tpu_custom_call.1} parent=1 // pred_check_branch
      %47 = sbr.rel (0) target = $region29
    $region28: #{tpu_custom_call.1} parent=1 // pred_region
      %49 = dma.done [#allocation3], 512
    $region29: #{tpu_custom_call.1} parent=1 // pred_fallthru
      _
    // Predicated region
    $region30: #{tpu_custom_call.1} parent=1 // pred_check
      _
    $region31: #{tpu_custom_call.1} parent=1 // pred_check_branch
      %51 = sbr.rel (0) target = $region33
    $region32: #{tpu_custom_call.1} parent=1 // pred_region
      %53 = dma.done [#allocation6], 4608
    $region33: #{tpu_custom_call.1} parent=1 // pred_fallthru
      _
    %v55 = vld [vmem:[#allocation2] sm:$0xff]
    %v56 = vld [vmem:[#allocation2 + $0x8] sm:$0xff]
    %v57 = vld [vmem:[#allocation2 + $0x10] sm:$0xff]
    %v58 = vld [vmem:[#allocation2 + $0x18] sm:$0xff]
    %v59 = vld [vmem:[%s1] sm:$0xf]
    %60 = vrot.lane.b32.xlu0 %v55, 17
    %v61 = vpop.permute.xlu0 %60
    %62 = vrot.lane.b32.xlu0 %v56, 17
    %v63 = vpop.permute.xlu0 %62
    %64 = vrot.lane.b32.xlu0 %v57, 17
    %v65 = vpop.permute.xlu0 %64
    %66 = vrot.lane.b32.xlu0 %v58, 17
    %v67 = vpop.permute.xlu0 %66
    %v68 = vlaneseq
    %v69 = vand.u32 %v68, 127
    %vm70 = vcmp.lt.s32.totalorder %v69, 17
    %v71 = vsel %vm70, %v65, %v67
    %v72 = vsel %vm70, %v63, %v65
    %v73 = vsel %vm70, %v61, %v63
    %v74 = vsel %vm70, %v67, %v61
    %v75 = vld [vmem:[#allocation5] sm:$0xff]
    %v76 = vld [vmem:[#allocation5 + $0x8] sm:$0xff]
    %v77 = vld [vmem:[#allocation5 + $0x10] sm:$0xff]
    %v78 = vld [vmem:[#allocation5 + $0x18] sm:$0xff]
    %v79 = vmul.f32 %v74, %v75
    %v80 = vmul.f32 %v73, %v76
    %v81 = vmul.f32 %v72, %v77
    %v82 = vmul.f32 %v71, %v78
    %v83 = vpack.c.bf16 %v80, %v79
    %v84 = vpack.c.bf16 %v82, %v81
    %85 = vrot.lane.b32.xlu0 %v55, 16
    %v86 = vpop.permute.xlu0 %85
    %87 = vrot.lane.b32.xlu0 %v56, 16
    %v88 = vpop.permute.xlu0 %87
    %89 = vrot.lane.b32.xlu0 %v57, 16
    %v90 = vpop.permute.xlu0 %89
    %91 = vrot.lane.b32.xlu0 %v58, 16
    %v92 = vpop.permute.xlu0 %91
    %vm93 = vcmp.lt.s32.totalorder %v69, 16
    %v94 = vsel %vm93, %v90, %v92
    %v95 = vsel %vm93, %v88, %v90
    %v96 = vsel %vm93, %v86, %v88
    %v97 = vsel %vm93, %v92, %v86
    %s98 = scalar_lea.vmem [#allocation5], 32
    %v99 = vld [vmem:[%s98] sm:$0xff]
    %v100 = vld [vmem:[%s98 + $0x8] sm:$0xff]
    %v101 = vld [vmem:[%s98 + $0x10] sm:$0xff]
    %v102 = vld [vmem:[%s98 + $0x18] sm:$0xff]
    %v103 = vmul.f32 %v97, %v99
    %v104 = vmul.f32 %v96, %v100
    %v105 = vmul.f32 %v95, %v101
    %v106 = vmul.f32 %v94, %v102
    %v107 = vpack.c.bf16 %v104, %v103
    %v108 = vpack.c.bf16 %v106, %v105
    %109 = vrot.lane.b32.xlu0 %v55, 15
    %v110 = vpop.permute.xlu0 %109
    %111 = vrot.lane.b32.xlu0 %v56, 15
    %v112 = vpop.permute.xlu0 %111
    %113 = vrot.lane.b32.xlu0 %v57, 15
    %v114 = vpop.permute.xlu0 %113
    %115 = vrot.lane.b32.xlu0 %v58, 15
    %v116 = vpop.permute.xlu0 %115
    %vm117 = vcmp.lt.s32.totalorder %v69, 15
    %v118 = vsel %vm117, %v114, %v116
    %v119 = vsel %vm117, %v112, %v114
    %v120 = vsel %vm117, %v110, %v112
    %v121 = vsel %vm117, %v116, %v110
    %s122 = scalar_lea.vmem [#allocation5], 64
    %v123 = vld [vmem:[%s122] sm:$0xff]
    %v124 = vld [vmem:[%s122 + $0x8] sm:$0xff]
    %v125 = vld [vmem:[%s122 + $0x10] sm:$0xff]
    %v126 = vld [vmem:[%s122 + $0x18] sm:$0xff]
    %v127 = vmul.f32 %v121, %v123
    %v128 = vmul.f32 %v120, %v124
    %v129 = vmul.f32 %v119, %v125
    %v130 = vmul.f32 %v118, %v126
    %v131 = vpack.c.bf16 %v128, %v127
    %v132 = vpack.c.bf16 %v130, %v129
    %133 = vrot.lane.b32.xlu0 %v55, 1
    %v134 = vpop.permute.xlu0 %133
    %135 = vrot.lane.b32.xlu0 %v56, 1
    %v136 = vpop.permute.xlu0 %135
    %137 = vrot.lane.b32.xlu0 %v57, 1
    %v138 = vpop.permute.xlu0 %137
    %139 = vrot.lane.b32.xlu0 %v58, 1
    %v140 = vpop.permute.xlu0 %139
    %vm141 = vcmp.lt.s32.totalorder %v69, 1
    %v142 = vsel %vm141, %v138, %v140
    %v143 = vsel %vm141, %v136, %v138
    %v144 = vsel %vm141, %v134, %v136
    %v145 = vsel %vm141, %v140, %v134
    %s146 = scalar_lea.vmem [#allocation5], 96
    %v147 = vld [vmem:[%s146] sm:$0xff]
    %v148 = vld [vmem:[%s146 + $0x8] sm:$0xff]
    %v149 = vld [vmem:[%s146 + $0x10] sm:$0xff]
    %v150 = vld [vmem:[%s146 + $0x18] sm:$0xff]
    %v151 = vmul.f32 %v145, %v147
    %v152 = vmul.f32 %v144, %v148
    %v153 = vmul.f32 %v143, %v149
    %v154 = vmul.f32 %v142, %v150
    %v155 = vpack.c.bf16 %v152, %v151
    %v156 = vpack.c.bf16 %v154, %v153
    %v157 = vpack.c.bf16 %v56, %v55
    %v158 = vpack.c.bf16 %v58, %v57
    %159 = vrot.lane.b32.xlu0 %v55, 127
    %v160 = vpop.permute.xlu0 %159
    %161 = vrot.lane.b32.xlu0 %v56, 127
    %v162 = vpop.permute.xlu0 %161
    %163 = vrot.lane.b32.xlu0 %v57, 127
    %v164 = vpop.permute.xlu0 %163
    %165 = vrot.lane.b32.xlu0 %v58, 127
    %v166 = vpop.permute.xlu0 %165
    %vm167 = vcmp.lt.s32.totalorder %v69, 127
    %v168 = vsel %vm167, %v164, %v166
    %v169 = vsel %vm167, %v162, %v164
    %v170 = vsel %vm167, %v160, %v162
    %v171 = vsel %vm167, %v166, %v160
    %s172 = scalar_lea.vmem [#allocation5], 160
    %v173 = vld [vmem:[%s172] sm:$0xff]
    %v174 = vld [vmem:[%s172 + $0x8] sm:$0xff]
    %v175 = vld [vmem:[%s172 + $0x10] sm:$0xff]
    %v176 = vld [vmem:[%s172 + $0x18] sm:$0xff]
    %v177 = vmul.f32 %v170, %v173
    %v178 = vmul.f32 %v169, %v174
    %v179 = vmul.f32 %v168, %v175
    %v180 = vmul.f32 %v171, %v176
    %v181 = vpack.c.bf16 %v178, %v177
    %v182 = vpack.c.bf16 %v180, %v179
    %183 = vrot.lane.b32.xlu0 %v55, 113
    %v184 = vpop.permute.xlu0 %183
    %185 = vrot.lane.b32.xlu0 %v56, 113
    %v186 = vpop.permute.xlu0 %185
    %187 = vrot.lane.b32.xlu0 %v57, 113
    %v188 = vpop.permute.xlu0 %187
    %189 = vrot.lane.b32.xlu0 %v58, 113
    %v190 = vpop.permute.xlu0 %189
    %vm191 = vcmp.lt.s32.totalorder %v69, 113
    %v192 = vsel %vm191, %v188, %v190
    %v193 = vsel %vm191, %v186, %v188
    %v194 = vsel %vm191, %v184, %v186
    %v195 = vsel %vm191, %v190, %v184
    %s196 = scalar_lea.vmem [#allocation5], 192
    %v197 = vld [vmem:[%s196] sm:$0xff]
    %v198 = vld [vmem:[%s196 + $0x8] sm:$0xff]
    %v199 = vld [vmem:[%s196 + $0x10] sm:$0xff]
    %v200 = vld [vmem:[%s196 + $0x18] sm:$0xff]
    %v201 = vmul.f32 %v194, %v197
    %v202 = vmul.f32 %v193, %v198
    %v203 = vmul.f32 %v192, %v199
    %v204 = vmul.f32 %v195, %v200
    %v205 = vpack.c.bf16 %v202, %v201
    %v206 = vpack.c.bf16 %v204, %v203
    %207 = vrot.lane.b32.xlu0 %v55, 112
    %v208 = vpop.permute.xlu0 %207
    %209 = vrot.lane.b32.xlu0 %v56, 112
    %v210 = vpop.permute.xlu0 %209
    %211 = vrot.lane.b32.xlu0 %v57, 112
    %v212 = vpop.permute.xlu0 %211
    %213 = vrot.lane.b32.xlu0 %v58, 112
    %v214 = vpop.permute.xlu0 %213
    %vm215 = vcmp.lt.s32.totalorder %v69, 112
    %v216 = vsel %vm215, %v212, %v214
    %v217 = vsel %vm215, %v210, %v212
    %v218 = vsel %vm215, %v208, %v210
    %v219 = vsel %vm215, %v214, %v208
    %s220 = scalar_lea.vmem [#allocation5], 224
    %v221 = vld [vmem:[%s220] sm:$0xff]
    %v222 = vld [vmem:[%s220 + $0x8] sm:$0xff]
    %v223 = vld [vmem:[%s220 + $0x10] sm:$0xff]
    %v224 = vld [vmem:[%s220 + $0x18] sm:$0xff]
    %v225 = vmul.f32 %v218, %v221
    %v226 = vmul.f32 %v217, %v222
    %v227 = vmul.f32 %v216, %v223
    %v228 = vmul.f32 %v219, %v224
    %v229 = vpack.c.bf16 %v226, %v225
    %v230 = vpack.c.bf16 %v228, %v227
    %231 = vrot.lane.b32.xlu0 %v55, 111
    %v232 = vpop.permute.xlu0 %231
    %233 = vrot.lane.b32.xlu0 %v56, 111
    %v234 = vpop.permute.xlu0 %233
    %235 = vrot.lane.b32.xlu0 %v57, 111
    %v236 = vpop.permute.xlu0 %235
    %237 = vrot.lane.b32.xlu0 %v58, 111
    %v238 = vpop.permute.xlu0 %237
    %vm239 = vcmp.lt.s32.totalorder %v69, 111
    %v240 = vsel %vm239, %v236, %v238
    %v241 = vsel %vm239, %v234, %v236
    %v242 = vsel %vm239, %v232, %v234
    %v243 = vsel %vm239, %v238, %v232
    %s244 = scalar_lea.vmem [#allocation5], 256
    %v245 = vld [vmem:[%s244] sm:$0xff]
    %v246 = vld [vmem:[%s244 + $0x8] sm:$0xff]
    %v247 = vld [vmem:[%s244 + $0x10] sm:$0xff]
    %v248 = vld [vmem:[%s244 + $0x18] sm:$0xff]
    %v249 = vmul.f32 %v242, %v245
    %v250 = vmul.f32 %v241, %v246
    %v251 = vmul.f32 %v240, %v247
    %v252 = vmul.f32 %v243, %v248
    %v253 = vpack.c.bf16 %v250, %v249
    %v254 = vpack.c.bf16 %v252, %v251
    %v257 = vunpack.c.l.b16 %v83
    %v258 = vunpack.c.h.b16 %v83
    %v259 = vunpack.c.l.b16 %v84
    %v260 = vunpack.c.h.b16 %v84
    %v261 = vpack.c.b16 %v257, %v257
    %v262 = vpack.c.b16 %v258, %v258
    %v263 = vpack.c.b16 %v259, %v259
    %v264 = vpack.c.b16 %v260, %v260
    %v267 = vunpack.c.l.b16 %v107
    %v268 = vunpack.c.h.b16 %v107
    %v269 = vunpack.c.l.b16 %v108
    %v270 = vunpack.c.h.b16 %v108
    %v271 = vpack.c.b16 %v267, %v267
    %v272 = vpack.c.b16 %v268, %v268
    %v273 = vpack.c.b16 %v269, %v269
    %v274 = vpack.c.b16 %v270, %v270
    %v277 = vunpack.c.l.b16 %v131
    %v278 = vunpack.c.h.b16 %v131
    %v279 = vunpack.c.l.b16 %v132
    %v280 = vunpack.c.h.b16 %v132
    %v281 = vpack.c.b16 %v277, %v277
    %v282 = vpack.c.b16 %v278, %v278
    %v283 = vpack.c.b16 %v279, %v279
    %v284 = vpack.c.b16 %v280, %v280
    %v287 = vunpack.c.l.b16 %v155
    %v288 = vunpack.c.h.b16 %v155
    %v289 = vunpack.c.l.b16 %v156
    %v290 = vunpack.c.h.b16 %v156
    %v291 = vpack.c.b16 %v287, %v287
    %v292 = vpack.c.b16 %v288, %v288
    %v293 = vpack.c.b16 %v289, %v289
    %v294 = vpack.c.b16 %v290, %v290
    %v297 = vunpack.c.l.b16 %v157
    %v298 = vunpack.c.h.b16 %v157
    %v299 = vunpack.c.l.b16 %v158
    %v300 = vunpack.c.h.b16 %v158
    %v301 = vpack.c.b16 %v297, %v297
    %v302 = vpack.c.b16 %v298, %v298
    %v303 = vpack.c.b16 %v299, %v299
    %v304 = vpack.c.b16 %v300, %v300
    %v307 = vunpack.c.l.b16 %v181
    %v308 = vunpack.c.h.b16 %v181
    %v309 = vunpack.c.l.b16 %v182
    %v310 = vunpack.c.h.b16 %v182
    %v311 = vpack.c.b16 %v307, %v307
    %v312 = vpack.c.b16 %v308, %v308
    %v313 = vpack.c.b16 %v309, %v309
    %v314 = vpack.c.b16 %v310, %v310
    %v317 = vunpack.c.l.b16 %v205
    %v318 = vunpack.c.h.b16 %v205
    %v319 = vunpack.c.l.b16 %v206
    %v320 = vunpack.c.h.b16 %v206
    %v321 = vpack.c.b16 %v317, %v317
    %v322 = vpack.c.b16 %v318, %v318
    %v323 = vpack.c.b16 %v319, %v319
    %v324 = vpack.c.b16 %v320, %v320
    %v327 = vunpack.c.l.b16 %v229
    %v328 = vunpack.c.h.b16 %v229
    %v329 = vunpack.c.l.b16 %v230
    %v330 = vunpack.c.h.b16 %v230
    %v331 = vpack.c.b16 %v327, %v327
    %v332 = vpack.c.b16 %v328, %v328
    %v333 = vpack.c.b16 %v329, %v329
    %v334 = vpack.c.b16 %v330, %v330
    %v337 = vunpack.c.l.b16 %v253
    %v338 = vunpack.c.h.b16 %v253
    %v339 = vunpack.c.l.b16 %v254
    %v340 = vunpack.c.h.b16 %v254
    %v341 = vpack.c.b16 %v337, %v337
    %v342 = vpack.c.b16 %v338, %v338
    %v343 = vpack.c.b16 %v339, %v339
    %v344 = vpack.c.b16 %v340, %v340
    %vm345 = vcmask 1043456
    %v348 = vsel %vm345, %v261, %v271
    %v352 = vsel %vm345, %v262, %v272
    %v356 = vsel %vm345, %v263, %v273
    %v360 = vsel %vm345, %v264, %v274
    %v364 = vsel %vm345, %v281, %v291
    %v368 = vsel %vm345, %v282, %v292
    %v372 = vsel %vm345, %v283, %v293
    %v376 = vsel %vm345, %v284, %v294
    %v380 = vsel %vm345, %v301, %v311
    %v384 = vsel %vm345, %v302, %v312
    %v388 = vsel %vm345, %v303, %v313
    %v392 = vsel %vm345, %v304, %v314
    %v396 = vsel %vm345, %v321, %v331
    %v400 = vsel %vm345, %v322, %v332
    %v404 = vsel %vm345, %v323, %v333
    %v408 = vsel %vm345, %v324, %v334
    %v410 = vld [vmem:[%s3] sm:$0xff]
    %412 = vset.pattern.permute.xlu0 0
    %413 = vperm.xlu0 %412, %v410
    %v414 = vpop.permute.xlu0 %413
    %vm416 = vcmask 588800
    %v418 = vsel %vm416, %v59, 0
    %v421 = vsel %vm345, %v341, 0
    %v424 = vsel %vm345, %v342, 0
    %v427 = vsel %vm345, %v343, 0
    %v430 = vsel %vm345, %v344, 0
    %432 = vmatpush.bf16.msra.mxu0 0
    %433 = vmatpush.bf16.msra.mxu0 0
    %434 = vmatpush.bf16.msra.mxu0 0
    %435 = vmatpush.bf16.msra.mxu0 %v421
    %436 = vmatpush.bf16.msra.mxu0 %v396
    %437 = vmatpush.bf16.msra.mxu0 %v380
    %438 = vmatpush.bf16.msra.mxu0 %v364
    %439 = vmatpush.bf16.msra.mxu0 %v348
    %440 = vmatmul.bf16.gmra.mxu0 %v418
    %v441 = vpop.f32.mrf.mxu0
    %v442 = vadd.f32 %v414, %v441
    %v443 = vpop.f32.mrf.mxu0
    %444 = vdwg.mxu0
    %445 = vmatpush.bf16.msra.mxu0 0
    %446 = vmatpush.bf16.msra.mxu0 0
    %447 = vmatpush.bf16.msra.mxu0 0
    %448 = vmatpush.bf16.msra.mxu0 %v424
    %449 = vmatpush.bf16.msra.mxu0 %v400
    %450 = vmatpush.bf16.msra.mxu0 %v384
    %451 = vmatpush.bf16.msra.mxu0 %v368
    %452 = vmatpush.bf16.msra.mxu0 %v352
    %453 = vmatmul.bf16.gmra.mxu0 %v418
    %v454 = vpop.f32.mrf.mxu0
    %v455 = vadd.f32 %v414, %v454
    %v456 = vpop.f32.mrf.mxu0
    %457 = vdwg.mxu0
    %458 = vmatpush.bf16.msra.mxu0 0
    %459 = vmatpush.bf16.msra.mxu0 0
    %460 = vmatpush.bf16.msra.mxu0 0
    %461 = vmatpush.bf16.msra.mxu0 %v427
    %462 = vmatpush.bf16.msra.mxu0 %v404
    %463 = vmatpush.bf16.msra.mxu0 %v388
    %464 = vmatpush.bf16.msra.mxu0 %v372
    %465 = vmatpush.bf16.msra.mxu0 %v356
    %466 = vmatmul.bf16.gmra.mxu0 %v418
    %v467 = vpop.f32.mrf.mxu0
    %v468 = vadd.f32 %v414, %v467
    %v469 = vpop.f32.mrf.mxu0
    %470 = vdwg.mxu0
    %471 = vmatpush.bf16.msra.mxu0 0
    %472 = vmatpush.bf16.msra.mxu0 0
    %473 = vmatpush.bf16.msra.mxu0 0
    %474 = vmatpush.bf16.msra.mxu0 %v430
    %475 = vmatpush.bf16.msra.mxu0 %v408
    %476 = vmatpush.bf16.msra.mxu0 %v392
    %477 = vmatpush.bf16.msra.mxu0 %v376
    %478 = vmatpush.bf16.msra.mxu0 %v360
    %479 = vmatmul.bf16.gmra.mxu0 %v418
    %v480 = vpop.f32.mrf.mxu0
    %v481 = vadd.f32 %v414, %v480
    %v482 = vpop.f32.mrf.mxu0
    %483 = vdwg.mxu0
    %v484 = vmax.f32 %v442, 0.0
    %v485 = vmax.f32 %v455, 0.0
    %v486 = vmax.f32 %v468, 0.0
    %v487 = vmax.f32 %v481, 0.0
    %v488 = vld [vmem:[%s2] sm:$0xf]
    %489 = vrot.lane.b32.xlu0 %v484, 17
    %v490 = vpop.permute.xlu0 %489
    %491 = vrot.lane.b32.xlu0 %v485, 17
    %v492 = vpop.permute.xlu0 %491
    %493 = vrot.lane.b32.xlu0 %v486, 17
    %v494 = vpop.permute.xlu0 %493
    %495 = vrot.lane.b32.xlu0 %v487, 17
    %v496 = vpop.permute.xlu0 %495
    %v497 = vsel %vm70, %v494, %v496
    %v498 = vsel %vm70, %v492, %v494
    %v499 = vsel %vm70, %v490, %v492
    %v500 = vsel %vm70, %v496, %v490
    %v501 = vmul.f32 %v500, %v75
    %v502 = vmul.f32 %v499, %v76
    %v503 = vmul.f32 %v498, %v77
    %v504 = vmul.f32 %v497, %v78
    %v505 = vpack.c.bf16 %v502, %v501
    %v506 = vpack.c.bf16 %v504, %v503
    %507 = vrot.lane.b32.xlu0 %v484, 16
    %v508 = vpop.permute.xlu0 %507
    %509 = vrot.lane.b32.xlu0 %v485, 16
    %v510 = vpop.permute.xlu0 %509
    %511 = vrot.lane.b32.xlu0 %v486, 16
    %v512 = vpop.permute.xlu0 %511
    %513 = vrot.lane.b32.xlu0 %v487, 16
    %v514 = vpop.permute.xlu0 %513
    %v515 = vsel %vm93, %v512, %v514
    %v516 = vsel %vm93, %v510, %v512
    %v517 = vsel %vm93, %v508, %v510
    %v518 = vsel %vm93, %v514, %v508
    %v519 = vmul.f32 %v518, %v99
    %v520 = vmul.f32 %v517, %v100
    %v521 = vmul.f32 %v516, %v101
    %v522 = vmul.f32 %v515, %v102
    %v523 = vpack.c.bf16 %v520, %v519
    %v524 = vpack.c.bf16 %v522, %v521
    %525 = vrot.lane.b32.xlu0 %v484, 15
    %v526 = vpop.permute.xlu0 %525
    %527 = vrot.lane.b32.xlu0 %v485, 15
    %v528 = vpop.permute.xlu0 %527
    %529 = vrot.lane.b32.xlu0 %v486, 15
    %v530 = vpop.permute.xlu0 %529
    %531 = vrot.lane.b32.xlu0 %v487, 15
    %v532 = vpop.permute.xlu0 %531
    %v533 = vsel %vm117, %v530, %v532
    %v534 = vsel %vm117, %v528, %v530
    %v535 = vsel %vm117, %v526, %v528
    %v536 = vsel %vm117, %v532, %v526
    %v537 = vmul.f32 %v536, %v123
    %v538 = vmul.f32 %v535, %v124
    %v539 = vmul.f32 %v534, %v125
    %v540 = vmul.f32 %v533, %v126
    %v541 = vpack.c.bf16 %v538, %v537
    %v542 = vpack.c.bf16 %v540, %v539
    %543 = vrot.lane.b32.xlu0 %v484, 1
    %v544 = vpop.permute.xlu0 %543
    %545 = vrot.lane.b32.xlu0 %v485, 1
    %v546 = vpop.permute.xlu0 %545
    %547 = vrot.lane.b32.xlu0 %v486, 1
    %v548 = vpop.permute.xlu0 %547
    %549 = vrot.lane.b32.xlu0 %v487, 1
    %v550 = vpop.permute.xlu0 %549
    %v551 = vsel %vm141, %v548, %v550
    %v552 = vsel %vm141, %v546, %v548
    %v553 = vsel %vm141, %v544, %v546
    %v554 = vsel %vm141, %v550, %v544
    %v555 = vmul.f32 %v554, %v147
    %v556 = vmul.f32 %v553, %v148
    %v557 = vmul.f32 %v552, %v149
    %v558 = vmul.f32 %v551, %v150
    %v559 = vpack.c.bf16 %v556, %v555
    %v560 = vpack.c.bf16 %v558, %v557
    %v561 = vpack.c.bf16 %v485, %v484
    %v562 = vpack.c.bf16 %v487, %v486
    %563 = vrot.lane.b32.xlu0 %v484, 127
    %v564 = vpop.permute.xlu0 %563
    %565 = vrot.lane.b32.xlu0 %v485, 127
    %v566 = vpop.permute.xlu0 %565
    %567 = vrot.lane.b32.xlu0 %v486, 127
    %v568 = vpop.permute.xlu0 %567
    %569 = vrot.lane.b32.xlu0 %v487, 127
    %v570 = vpop.permute.xlu0 %569
    %v571 = vsel %vm167, %v568, %v570
    %v572 = vsel %vm167, %v566, %v568
    %v573 = vsel %vm167, %v564, %v566
    %v574 = vsel %vm167, %v570, %v564
    %v575 = vmul.f32 %v573, %v173
    %v576 = vmul.f32 %v572, %v174
    %v577 = vmul.f32 %v571, %v175
    %v578 = vmul.f32 %v574, %v176
    %v579 = vpack.c.bf16 %v576, %v575
    %v580 = vpack.c.bf16 %v578, %v577
    %581 = vrot.lane.b32.xlu0 %v484, 113
    %v582 = vpop.permute.xlu0 %581
    %583 = vrot.lane.b32.xlu0 %v485, 113
    %v584 = vpop.permute.xlu0 %583
    %585 = vrot.lane.b32.xlu0 %v486, 113
    %v586 = vpop.permute.xlu0 %585
    %587 = vrot.lane.b32.xlu0 %v487, 113
    %v588 = vpop.permute.xlu0 %587
    %v589 = vsel %vm191, %v586, %v588
    %v590 = vsel %vm191, %v584, %v586
    %v591 = vsel %vm191, %v582, %v584
    %v592 = vsel %vm191, %v588, %v582
    %v593 = vmul.f32 %v591, %v197
    %v594 = vmul.f32 %v590, %v198
    %v595 = vmul.f32 %v589, %v199
    %v596 = vmul.f32 %v592, %v200
    %v597 = vpack.c.bf16 %v594, %v593
    %v598 = vpack.c.bf16 %v596, %v595
    %599 = vrot.lane.b32.xlu0 %v484, 112
    %v600 = vpop.permute.xlu0 %599
    %601 = vrot.lane.b32.xlu0 %v485, 112
    %v602 = vpop.permute.xlu0 %601
    %603 = vrot.lane.b32.xlu0 %v486, 112
    %v604 = vpop.permute.xlu0 %603
    %605 = vrot.lane.b32.xlu0 %v487, 112
    %v606 = vpop.permute.xlu0 %605
    %v607 = vsel %vm215, %v604, %v606
    %v608 = vsel %vm215, %v602, %v604
    %v609 = vsel %vm215, %v600, %v602
    %v610 = vsel %vm215, %v606, %v600
    %v611 = vmul.f32 %v609, %v221
    %v612 = vmul.f32 %v608, %v222
    %v613 = vmul.f32 %v607, %v223
    %v614 = vmul.f32 %v610, %v224
    %v615 = vpack.c.bf16 %v612, %v611
    %v616 = vpack.c.bf16 %v614, %v613
    %617 = vrot.lane.b32.xlu0 %v484, 111
    %v618 = vpop.permute.xlu0 %617
    %619 = vrot.lane.b32.xlu0 %v485, 111
    %v620 = vpop.permute.xlu0 %619
    %621 = vrot.lane.b32.xlu0 %v486, 111
    %v622 = vpop.permute.xlu0 %621
    %623 = vrot.lane.b32.xlu0 %v487, 111
    %v624 = vpop.permute.xlu0 %623
    %v625 = vsel %vm239, %v622, %v624
    %v626 = vsel %vm239, %v620, %v622
    %v627 = vsel %vm239, %v618, %v620
    %v628 = vsel %vm239, %v624, %v618
    %v629 = vmul.f32 %v627, %v245
    %v630 = vmul.f32 %v626, %v246
    %v631 = vmul.f32 %v625, %v247
    %v632 = vmul.f32 %v628, %v248
    %v633 = vpack.c.bf16 %v630, %v629
    %v634 = vpack.c.bf16 %v632, %v631
    %v637 = vunpack.c.l.b16 %v505
    %v638 = vunpack.c.h.b16 %v505
    %v639 = vunpack.c.l.b16 %v506
    %v640 = vunpack.c.h.b16 %v506
    %v641 = vpack.c.b16 %v637, %v637
    %v642 = vpack.c.b16 %v638, %v638
    %v643 = vpack.c.b16 %v639, %v639
    %v644 = vpack.c.b16 %v640, %v640
    %v647 = vunpack.c.l.b16 %v523
    %v648 = vunpack.c.h.b16 %v523
    %v649 = vunpack.c.l.b16 %v524
    %v650 = vunpack.c.h.b16 %v524
    %v651 = vpack.c.b16 %v647, %v647
    %v652 = vpack.c.b16 %v648, %v648
    %v653 = vpack.c.b16 %v649, %v649
    %v654 = vpack.c.b16 %v650, %v650
    %v657 = vunpack.c.l.b16 %v541
    %v658 = vunpack.c.h.b16 %v541
    %v659 = vunpack.c.l.b16 %v542
    %v660 = vunpack.c.h.b16 %v542
    %v661 = vpack.c.b16 %v657, %v657
    %v662 = vpack.c.b16 %v658, %v658
    %v663 = vpack.c.b16 %v659, %v659
    %v664 = vpack.c.b16 %v660, %v660
    %v667 = vunpack.c.l.b16 %v559
    %v668 = vunpack.c.h.b16 %v559
    %v669 = vunpack.c.l.b16 %v560
    %v670 = vunpack.c.h.b16 %v560
    %v671 = vpack.c.b16 %v667, %v667
    %v672 = vpack.c.b16 %v668, %v668
    %v673 = vpack.c.b16 %v669, %v669
    %v674 = vpack.c.b16 %v670, %v670
    %v677 = vunpack.c.l.b16 %v561
    %v678 = vunpack.c.h.b16 %v561
    %v679 = vunpack.c.l.b16 %v562
    %v680 = vunpack.c.h.b16 %v562
    %v681 = vpack.c.b16 %v677, %v677
    %v682 = vpack.c.b16 %v678, %v678
    %v683 = vpack.c.b16 %v679, %v679
    %v684 = vpack.c.b16 %v680, %v680
    %v687 = vunpack.c.l.b16 %v579
    %v688 = vunpack.c.h.b16 %v579
    %v689 = vunpack.c.l.b16 %v580
    %v690 = vunpack.c.h.b16 %v580
    %v691 = vpack.c.b16 %v687, %v687
    %v692 = vpack.c.b16 %v688, %v688
    %v693 = vpack.c.b16 %v689, %v689
    %v694 = vpack.c.b16 %v690, %v690
    %v697 = vunpack.c.l.b16 %v597
    %v698 = vunpack.c.h.b16 %v597
    %v699 = vunpack.c.l.b16 %v598
    %v700 = vunpack.c.h.b16 %v598
    %v701 = vpack.c.b16 %v697, %v697
    %v702 = vpack.c.b16 %v698, %v698
    %v703 = vpack.c.b16 %v699, %v699
    %v704 = vpack.c.b16 %v700, %v700
    %v707 = vunpack.c.l.b16 %v615
    %v708 = vunpack.c.h.b16 %v615
    %v709 = vunpack.c.l.b16 %v616
    %v710 = vunpack.c.h.b16 %v616
    %v711 = vpack.c.b16 %v707, %v707
    %v712 = vpack.c.b16 %v708, %v708
    %v713 = vpack.c.b16 %v709, %v709
    %v714 = vpack.c.b16 %v710, %v710
    %v717 = vunpack.c.l.b16 %v633
    %v718 = vunpack.c.h.b16 %v633
    %v719 = vunpack.c.l.b16 %v634
    %v720 = vunpack.c.h.b16 %v634
    %v721 = vpack.c.b16 %v717, %v717
    %v722 = vpack.c.b16 %v718, %v718
    %v723 = vpack.c.b16 %v719, %v719
    %v724 = vpack.c.b16 %v720, %v720
    %v727 = vsel %vm345, %v641, %v651
    %v731 = vsel %vm345, %v642, %v652
    %v735 = vsel %vm345, %v643, %v653
    %v739 = vsel %vm345, %v644, %v654
    %v743 = vsel %vm345, %v661, %v671
    %v747 = vsel %vm345, %v662, %v672
    %v751 = vsel %vm345, %v663, %v673
    %v755 = vsel %vm345, %v664, %v674
    %v759 = vsel %vm345, %v681, %v691
    %v763 = vsel %vm345, %v682, %v692
    %v767 = vsel %vm345, %v683, %v693
    %v771 = vsel %vm345, %v684, %v694
    %v775 = vsel %vm345, %v701, %v711
    %v779 = vsel %vm345, %v702, %v712
    %v783 = vsel %vm345, %v703, %v713
    %v787 = vsel %vm345, %v704, %v714
    %v789 = vld [vmem:[%s4] sm:$0xff]
    %791 = vset.pattern.permute.xlu0 0
    %792 = vperm.xlu0 %791, %v789
    %v793 = vpop.permute.xlu0 %792
    %v796 = vsel %vm416, %v488, 0
    %v799 = vsel %vm345, %v721, 0
    %v802 = vsel %vm345, %v722, 0
    %v805 = vsel %vm345, %v723, 0
    %v808 = vsel %vm345, %v724, 0
    %810 = vmatpush.bf16.msra.mxu0 0
    %811 = vmatpush.bf16.msra.mxu0 0
    %812 = vmatpush.bf16.msra.mxu0 0
    %813 = vmatpush.bf16.msra.mxu0 %v799
    %814 = vmatpush.bf16.msra.mxu0 %v775
    %815 = vmatpush.bf16.msra.mxu0 %v759
    %816 = vmatpush.bf16.msra.mxu0 %v743
    %817 = vmatpush.bf16.msra.mxu0 %v727
    %818 = vmatmul.bf16.gmra.mxu0 %v796
    %v819 = vpop.f32.mrf.mxu0
    %v820 = vadd.f32 %v793, %v819
    %v821 = vpop.f32.mrf.mxu0
    %822 = vdwg.mxu0
    %823 = vmatpush.bf16.msra.mxu0 0
    %824 = vmatpush.bf16.msra.mxu0 0
    %825 = vmatpush.bf16.msra.mxu0 0
    %826 = vmatpush.bf16.msra.mxu0 %v802
    %827 = vmatpush.bf16.msra.mxu0 %v779
    %828 = vmatpush.bf16.msra.mxu0 %v763
    %829 = vmatpush.bf16.msra.mxu0 %v747
    %830 = vmatpush.bf16.msra.mxu0 %v731
    %831 = vmatmul.bf16.gmra.mxu0 %v796
    %v832 = vpop.f32.mrf.mxu0
    %v833 = vadd.f32 %v793, %v832
    %v834 = vpop.f32.mrf.mxu0
    %835 = vdwg.mxu0
    %836 = vmatpush.bf16.msra.mxu0 0
    %837 = vmatpush.bf16.msra.mxu0 0
    %838 = vmatpush.bf16.msra.mxu0 0
    %839 = vmatpush.bf16.msra.mxu0 %v805
    %840 = vmatpush.bf16.msra.mxu0 %v783
    %841 = vmatpush.bf16.msra.mxu0 %v767
    %842 = vmatpush.bf16.msra.mxu0 %v751
    %843 = vmatpush.bf16.msra.mxu0 %v735
    %844 = vmatmul.bf16.gmra.mxu0 %v796
    %v845 = vpop.f32.mrf.mxu0
    %v846 = vadd.f32 %v793, %v845
    %v847 = vpop.f32.mrf.mxu0
    %848 = vdwg.mxu0
    %849 = vmatpush.bf16.msra.mxu0 0
    %850 = vmatpush.bf16.msra.mxu0 0
    %851 = vmatpush.bf16.msra.mxu0 0
    %852 = vmatpush.bf16.msra.mxu0 %v808
    %853 = vmatpush.bf16.msra.mxu0 %v787
    %854 = vmatpush.bf16.msra.mxu0 %v771
    %855 = vmatpush.bf16.msra.mxu0 %v755
    %856 = vmatpush.bf16.msra.mxu0 %v739
    %857 = vmatmul.bf16.gmra.mxu0 %v796
    %v858 = vpop.f32.mrf.mxu0
    %v859 = vadd.f32 %v793, %v858
    %v860 = vpop.f32.mrf.mxu0
    %861 = vdwg.mxu0
    %v862 = vadd.f32 %v820, %v55
    %v863 = vadd.f32 %v833, %v56
    %v864 = vadd.f32 %v846, %v57
    %v865 = vadd.f32 %v859, %v58
    %v866 = vmax.f32 %v862, 0.0
    %v867 = vmax.f32 %v863, 0.0
    %v868 = vmax.f32 %v864, 0.0
    %v869 = vmax.f32 %v865, 0.0
    %870 = vst [vmem:[#allocation7] sm:$0xff] %v866
    %871 = vst [vmem:[#allocation7 + $0x8] sm:$0xff] %v867
    %872 = vst [vmem:[#allocation7 + $0x10] sm:$0xff] %v868
    %873 = vst [vmem:[#allocation7 + $0x18] sm:$0xff] %v869
    // Predicated region
    $region34: #{tpu_custom_call.1} parent=1 // pred_check
      _
    $region35: #{tpu_custom_call.1} parent=1 // pred_check_branch
      %875 = sbr.rel (0) target = $region37
    $region36: #{tpu_custom_call.1} parent=1 // pred_region
      %877 = vsyncadd [#allocation4], 0
      %s879 = sshll.u32 [#allocation7], 4
      %s880 = int_to_ptr.vmem [resolvable:$true] %s879
      %s881 = sshll.u32 %s6, 4
      %s882 = int_to_ptr.hbm [resolvable:$true] %s881
      %884 = dma.vmem_to_hbm [thread:$0]  %s880, 512, %s882, [#allocation4]
    $region37: #{tpu_custom_call.1} parent=1 // pred_fallthru
      _
    // Predicated region
    $region38: #{tpu_custom_call.1} parent=1 // pred_check
      _
    $region39: #{tpu_custom_call.1} parent=1 // pred_check_branch
      %886 = sbr.rel (0) target = $region41
    $region40: #{tpu_custom_call.1} parent=1 // pred_region
      %888 = dma.done [#allocation4], 512
    $region41: #{tpu_custom_call.1} parent=1 // pred_fallthru
      _
    %889 = vsyncpa [#allocation3], 1
    %890 = vsyncpa [#allocation6], 1
    %891 = vsyncpa [#allocation4], 1

</llo_original>
